<compile_context>
chip_gen: v7x
topology: tpu7x:2x2x1
jax: 0.10.0
libtpu: 0.0.40
codegen_flags: <defaults>
</compile_context>

<pallas_src>
import jax
import jax.numpy as jnp
from jax.experimental import pallas as pl
from jax.experimental.pallas import tpu as pltpu


# ---------------------------------------------------------------------------
# Fused kernel: one grid step = G source nodes (and their G*B edges).
# ---------------------------------------------------------------------------
def _fused_kernel(h_ref, e_ref, wnp_ref, wblk_ref, vblk_ref, gexp_ref,
                  nf_ref, ew_ref):
    dnout = nf_ref.shape[-1]

    # Node features + folded node-attention column in ONE MXU matmul:
    #   wnp = [ W_n^T | W_n^T @ w_a_node^T ]  ->  nf_full: [G, Dnout + 1]
    nf_full = jnp.dot(h_ref[...], wnp_ref[...], preferred_element_type=jnp.float32)
    nf = nf_full[:, :dnout]                                     # [G, Dnout]
    a_node = nf_full[:, dnout:dnout + 1]                        # [G, 1]
    nf_ref[...] = nf.astype(nf_ref.dtype)

    # Edge features, lane-dense [G, B*Eout], via block-diagonal kron(I_B, W_e^T)
    e_blk = e_ref[...]
    e_ft = jnp.dot(e_blk, wblk_ref[...], preferred_element_type=jnp.float32)

    # Attention logits: edge part folded into a single matmul -> [G, B]
    a_edge = jnp.dot(e_blk, vblk_ref[...], preferred_element_type=jnp.float32)
    a = a_edge + a_node                                          # [G, B]

    # leaky_relu (torch default negative_slope = 0.01)
    a = jnp.where(a > 0, a, 0.01 * a)

    # stable softmax over each source node's group of B out-edges
    a_max = jnp.max(a, axis=-1, keepdims=True)
    p = jnp.exp(a - a_max)
    gamma = p / jnp.sum(p, axis=-1, keepdims=True)               # [G, B]

    # Expand gamma to per-feature lanes via tiny matmul kron(I_B, 1_{1xEout})
    # (avoids cross-lane reshapes) and scale the edge features.
    gamma_exp = jnp.dot(gamma, gexp_ref[...],
                        preferred_element_type=jnp.float32)      # [G, B*Eout]
    ew_ref[...] = (gamma_exp * e_ft).astype(ew_ref.dtype)        # lane-dense store


# ---------------------------------------------------------------------------
# Wrapper
# ---------------------------------------------------------------------------
def weighted_agg_edge(h, e, w_n, w_e, w_a, *, group_tile=2048):
    """h: [N, Din], e: [N, B, Ein] (edges grouped by src node).
    w_n: [Dnout, Din], w_e: [Eout, Ein], w_a: [1, Eout + Dnout]  (torch layout,
    concat order of the attention input is [edge_ft, src_node_ft]).
    Output dtypes follow h / e (pass bf16 inputs for bf16 I/O)."""
    N, Din = h.shape
    N_e, B, Ein = e.shape
    assert N_e == N
    Dnout = w_n.shape[0]
    Eout = w_e.shape[0]
    f32 = jnp.float32

    # --- weight preprocessing (plain XLA, tiny, const-folded under jit) ---
    wn_t = w_n.T.astype(f32)                                   # [Din, Dnout]
    wan_col = w_a[:, Eout:].T.astype(f32)                      # [Dnout, 1]  node part of attn
    wn_plus = jnp.concatenate([wn_t, wn_t @ wan_col], axis=1)  # [Din, Dnout+1]
    we_t = w_e.T.astype(f32)                                   # [Ein, Eout]
    wa_e = w_a[:, :Eout].T.astype(f32)                         # [Eout, 1]   edge part of attn

    eye_b = jnp.eye(B, dtype=f32)
    w_blk = jnp.kron(eye_b, we_t)                              # [B*Ein, B*Eout] block-diag W_e^T
    v_blk = jnp.kron(eye_b, we_t @ wa_e)                       # [B*Ein, B]      folded attn proj
    g_exp = jnp.kron(eye_b, jnp.ones((1, Eout), f32))          # [B, B*Eout]     gamma expander

    # Heavy paths stay in the input dtype (bf16 inputs -> bf16 MXU feeds, f32 acc).
    wn_plus = wn_plus.astype(h.dtype)
    w_blk = w_blk.astype(e.dtype)
    v_blk = v_blk.astype(e.dtype)

    e2 = e.reshape(N, B * Ein)                                  # contiguous flatten, free

    # --- tiling over source nodes: no host-side pad or post-slice ---
    # Partial final block: Pallas masks OOB writes; garbage tail rows are
    # row-local in all of the math above, so they never contaminate valid rows.
    G = group_tile if N >= group_tile else N
    grid = (pl.cdiv(N, G),)

    nf, ew_flat = pl.pallas_call(
        _fused_kernel,
        out_shape=(jax.ShapeDtypeStruct((N, Dnout), h.dtype),
                   jax.ShapeDtypeStruct((N, B * Eout), e.dtype)),
        grid=grid,
        in_specs=[
            pl.BlockSpec((G, Din), lambda g: (g, 0)),             # h tile
            pl.BlockSpec((G, B * Ein), lambda g: (g, 0)),         # edge tile (lane-dense)
            pl.BlockSpec((Din, Dnout + 1), lambda g: (0, 0)),     # [W_n^T | attn-node col]
            pl.BlockSpec((B * Ein, B * Eout), lambda g: (0, 0)),  # block-diag W_e^T
            pl.BlockSpec((B * Ein, B), lambda g: (0, 0)),         # folded attn (edge)
            pl.BlockSpec((B, B * Eout), lambda g: (0, 0)),        # gamma expander
        ],
        out_specs=(
            pl.BlockSpec((G, Dnout), lambda g: (g, 0)),
            pl.BlockSpec((G, B * Eout), lambda g: (g, 0)),
        ),
        compiler_params=pltpu.CompilerParams(
            dimension_semantics=("parallel",),                    # independent tiles (megacore)
            vmem_limit_bytes=32 * 1024 * 1024,                    # safe on v7x's 64 MiB/TC
        ),
    )(h, e2, wn_plus, w_blk, v_blk, g_exp)

    return nf, ew_flat.reshape(N, B, Eout)


# ---------------------------------------------------------------------------
# Pure-JAX reference (matches the PyTorch forward semantics)
# ---------------------------------------------------------------------------
def reference(h, e, w_n, w_e, w_a):
    nf = h @ w_n.T                                              # [N, Dnout]
    e_ft = jnp.einsum("nbe,fe->nbf", e, w_e)                    # [N, B, Eout]
    src = jnp.broadcast_to(nf[:, None, :], e_ft.shape[:2] + (nf.shape[-1],))
    z2 = jnp.concatenate([e_ft, src], axis=2)                   # [N, B, Eout+Dnout]
    a = jnp.einsum("nbd,od->nbo", z2, w_a)                      # [N, B, 1]
    lr = jnp.where(a > 0, a, 0.01 * a)
    gamma = jax.nn.softmax(lr, axis=1)
    return nf, gamma * e_ft


if __name__ == "__main__":
    # Small shapes consistent with the module's __init__ (regular graph,
    # B out-edges per source node, edges pre-grouped by src).
    N = 8            # number of nodes (= number of src groups)
    B = 8            # out-edges per source node
    node_in_dim = 32
    node_ft_out_dim = 16
    edge_dim = 16
    edge_ft_out_dim = 16

    key = jax.random.PRNGKey(0)
    k_h, k_e, k_wn, k_we, k_wa = jax.random.split(key, 5)

    h = jax.random.normal(k_h, (N, node_in_dim), dtype=jnp.float32)
    e = jax.random.normal(k_e, (N, B, edge_dim), dtype=jnp.float32)

    # torch Linear weight layout: [out, in], bias=False in the module
    w_n = jax.random.normal(k_wn, (node_ft_out_dim, node_in_dim), jnp.float32) * 0.1
    w_e = jax.random.normal(k_we, (edge_ft_out_dim, edge_dim), jnp.float32) * 0.1
    w_a = jax.random.normal(k_wa, (1, edge_ft_out_dim + node_ft_out_dim), jnp.float32) * 0.1

    # --- f32 path, single full-array block ---
    node_feat, e_weighted = weighted_agg_edge(h, e, w_n, w_e, w_a)
    jax.block_until_ready((node_feat, e_weighted))
    nf_ref, ew_ref = reference(h, e, w_n, w_e, w_a)
    assert jnp.allclose(node_feat, nf_ref, atol=1e-5, rtol=1e-5), "node_feat mismatch"
    assert jnp.allclose(e_weighted, ew_ref, atol=1e-5, rtol=1e-4), "e_weighted mismatch"

    # --- non-divisible tiling path (partial last block, no host pad/slice) ---
    N2 = 300
    k_h2, k_e2 = jax.random.split(jax.random.PRNGKey(1), 2)
    h2 = jax.random.normal(k_h2, (N2, node_in_dim), jnp.float32)
    e2 = jax.random.normal(k_e2, (N2, B, edge_dim), jnp.float32)
    nf2, ew2 = weighted_agg_edge(h2, e2, w_n, w_e, w_a, group_tile=128)
    jax.block_until_ready((nf2, ew2))
    nf2_ref, ew2_ref = reference(h2, e2, w_n, w_e, w_a)
    assert jnp.allclose(nf2, nf2_ref, atol=1e-5, rtol=1e-5), "tiled node_feat mismatch"
    assert jnp.allclose(ew2, ew2_ref, atol=1e-5, rtol=1e-4), "tiled e_weighted mismatch"

    # --- bf16 I/O path (halves HBM traffic on the dominant edge arrays) ---
    nf3, ew3 = weighted_agg_edge(h.astype(jnp.bfloat16), e.astype(jnp.bfloat16),
                                 w_n, w_e, w_a)
    jax.block_until_ready((nf3, ew3))
    assert jnp.allclose(nf3.astype(jnp.float32), nf_ref, atol=5e-2, rtol=5e-2), \
        "bf16 node_feat mismatch"
    assert jnp.allclose(ew3.astype(jnp.float32), ew_ref, atol=5e-2, rtol=5e-2), \
        "bf16 e_weighted mismatch"

    print("KERNEL_OK")
</pallas_src>

<mosaic_0001>
module attributes {stable_mosaic.version = 11 : i64} {
  func.func @_fused_kernel(%arg0: i32, %arg1: memref<8x32xf32, #tpu.memory_space<vmem>>, %arg2: memref<8x128xf32, #tpu.memory_space<vmem>>, %arg3: memref<32x17xf32, #tpu.memory_space<vmem>>, %arg4: memref<128x128xf32, #tpu.memory_space<vmem>>, %arg5: memref<128x8xf32, #tpu.memory_space<vmem>>, %arg6: memref<8x128xf32, #tpu.memory_space<vmem>>, %arg7: memref<8x16xf32, #tpu.memory_space<vmem>>, %arg8: memref<8x128xf32, #tpu.memory_space<vmem>>) attributes {dimension_semantics = [#tpu.dimension_semantics<parallel>], iteration_bounds = array<i64: 1>, scalar_prefetch = 0 : i64, scratch_operands = 0 : i64, tpu.core_type = #tpu.core_type<tc>, window_params = [{transform_indices = @transform_0, window_bounds = array<i64: 8, 32>}, {transform_indices = @transform_1, window_bounds = array<i64: 8, 128>}, {pipeline_mode = #tpu.pipeline_mode<synchronous>, transform_indices = @transform_2, window_bounds = array<i64: 32, 17>}, {pipeline_mode = #tpu.pipeline_mode<synchronous>, transform_indices = @transform_3, window_bounds = array<i64: 128, 128>}, {pipeline_mode = #tpu.pipeline_mode<synchronous>, transform_indices = @transform_4, window_bounds = array<i64: 128, 8>}, {pipeline_mode = #tpu.pipeline_mode<synchronous>, transform_indices = @transform_5, window_bounds = array<i64: 8, 128>}, {transform_indices = @transform_6, window_bounds = array<i64: 8, 16>}, {transform_indices = @transform_7, window_bounds = array<i64: 8, 128>}]} {
    %c0 = arith.constant 0 : index
    %c0_0 = arith.constant 0 : index
    %0 = vector.load %arg1[%c0, %c0_0] : memref<8x32xf32, #tpu.memory_space<vmem>>, vector<8x32xf32>
    %c0_1 = arith.constant 0 : index
    %c0_2 = arith.constant 0 : index
    %1 = vector.load %arg3[%c0_1, %c0_2] : memref<32x17xf32, #tpu.memory_space<vmem>>, vector<32x17xf32>
    %cst = arith.constant dense<0.000000e+00> : vector<8x17xf32>
    %2 = tpu.matmul %0, %1, %cst {dimension_numbers = #tpu.dot_dimension_numbers<[1], [0], [0], [1], [0, 0, 1, 1], [], []>} : vector<8x32xf32>, vector<32x17xf32>, vector<8x17xf32> -> vector<8x17xf32>
    %3 = vector.extract_strided_slice %2 {offsets = [0, 0], sizes = [8, 16], strides = [1, 1]} : vector<8x17xf32> to vector<8x16xf32>
    %4 = vector.extract_strided_slice %2 {offsets = [0, 16], sizes = [8, 1], strides = [1, 1]} : vector<8x17xf32> to vector<8x1xf32>
    %c0_3 = arith.constant 0 : index
    %c0_4 = arith.constant 0 : index
    %5 = vector.load %arg7[%c0_3, %c0_4] : memref<8x16xf32, #tpu.memory_space<vmem>>, vector<8x16xf32>
    tpu.vector_store %arg7[%c0_3, %c0_4], %3 {strides = array<i32>} : memref<8x16xf32, #tpu.memory_space<vmem>>, vector<8x16xf32>,
    %c0_5 = arith.constant 0 : index
    %c0_6 = arith.constant 0 : index
    %6 = vector.load %arg2[%c0_5, %c0_6] : memref<8x128xf32, #tpu.memory_space<vmem>>, vector<8x128xf32>
    %c0_7 = arith.constant 0 : index
    %c0_8 = arith.constant 0 : index
    %7 = vector.load %arg4[%c0_7, %c0_8] : memref<128x128xf32, #tpu.memory_space<vmem>>, vector<128x128xf32>
    %cst_9 = arith.constant dense<0.000000e+00> : vector<8x128xf32>
    %8 = tpu.matmul %6, %7, %cst_9 {dimension_numbers = #tpu.dot_dimension_numbers<[1], [0], [0], [1], [0, 0, 1, 1], [], []>} : vector<8x128xf32>, vector<128x128xf32>, vector<8x128xf32> -> vector<8x128xf32>
    %c0_10 = arith.constant 0 : index
    %c0_11 = arith.constant 0 : index
    %9 = vector.load %arg5[%c0_10, %c0_11] : memref<128x8xf32, #tpu.memory_space<vmem>>, vector<128x8xf32>
    %cst_12 = arith.constant dense<0.000000e+00> : vector<8x8xf32>
    %10 = tpu.matmul %6, %9, %cst_12 {dimension_numbers = #tpu.dot_dimension_numbers<[1], [0], [0], [1], [0, 0, 1, 1], [], []>} : vector<8x128xf32>, vector<128x8xf32>, vector<8x8xf32> -> vector<8x8xf32>
    %11 = vector.broadcast %4 : vector<8x1xf32> to vector<8x8xf32>
    %12 = arith.addf %10, %11 : vector<8x8xf32>
    %cst_13 = arith.constant 0.000000e+00 : f32
    %13 = vector.broadcast %cst_13 : f32 to vector<8x8xf32>
    %14 = arith.cmpf ogt, %12, %13 : vector<8x8xf32>
    %cst_14 = arith.constant 0.00999999977 : f32
    %15 = vector.broadcast %cst_14 : f32 to vector<8x8xf32>
    %16 = arith.mulf %15, %12 : vector<8x8xf32>
    %17 = arith.select %14, %12, %16 : vector<8x8xi1>, vector<8x8xf32>
    %cst_15 = arith.constant dense<0xFF800000> : vector<8xf32>
    %18 = vector.multi_reduction <maximumf>, %17, %cst_15 [1] : vector<8x8xf32> to vector<8xf32>
    %19 = vector.shape_cast %18 : vector<8xf32> to vector<8x1xf32>
    %20 = vector.broadcast %19 : vector<8x1xf32> to vector<8x8xf32>
    %21 = arith.subf %17, %20 : vector<8x8xf32>
    %22 = math.exp %21 : vector<8x8xf32>
    %cst_16 = arith.constant dense<0.000000e+00> : vector<8xf32>
    %23 = vector.multi_reduction <add>, %22, %cst_16 [1] : vector<8x8xf32> to vector<8xf32>
    %24 = vector.shape_cast %23 : vector<8xf32> to vector<8x1xf32>
    %25 = vector.broadcast %24 : vector<8x1xf32> to vector<8x8xf32>
    %26 = arith.divf %22, %25 : vector<8x8xf32>
    %c0_17 = arith.constant 0 : index
    %c0_18 = arith.constant 0 : index
    %27 = vector.load %arg6[%c0_17, %c0_18] : memref<8x128xf32, #tpu.memory_space<vmem>>, vector<8x128xf32>
    %cst_19 = arith.constant dense<0.000000e+00> : vector<8x128xf32>
    %28 = tpu.matmul %26, %27, %cst_19 {dimension_numbers = #tpu.dot_dimension_numbers<[1], [0], [0], [1], [0, 0, 1, 1], [], []>} : vector<8x8xf32>, vector<8x128xf32>, vector<8x128xf32> -> vector<8x128xf32>
    %29 = arith.mulf %28, %8 : vector<8x128xf32>
    %c0_20 = arith.constant 0 : index
    %c0_21 = arith.constant 0 : index
    %30 = vector.load %arg8[%c0_20, %c0_21] : memref<8x128xf32, #tpu.memory_space<vmem>>, vector<8x128xf32>
    tpu.vector_store %arg8[%c0_20, %c0_21], %29 {strides = array<i32>} : memref<8x128xf32, #tpu.memory_space<vmem>>, vector<8x128xf32>,
    return
  }
  func.func @transform_0(%arg0: i32) -> (i32, i32) {
    %c0_i32 = arith.constant 0 : i32
    %c0_i32_0 = arith.constant 0 : i32
    return %arg0, %c0_i32 : i32, i32
  }
  func.func @transform_1(%arg0: i32) -> (i32, i32) {
    %c0_i32 = arith.constant 0 : i32
    %c0_i32_0 = arith.constant 0 : i32
    return %arg0, %c0_i32 : i32, i32
  }
  func.func @transform_2(%arg0: i32) -> (i32, i32) {
    %c0_i32 = arith.constant 0 : i32
    %c0_i32_0 = arith.constant 0 : i32
    %c0_i32_1 = arith.constant 0 : i32
    return %c0_i32, %c0_i32_0 : i32, i32
  }
  func.func @transform_3(%arg0: i32) -> (i32, i32) {
    %c0_i32 = arith.constant 0 : i32
    %c0_i32_0 = arith.constant 0 : i32
    %c0_i32_1 = arith.constant 0 : i32
    return %c0_i32, %c0_i32_0 : i32, i32
  }
  func.func @transform_4(%arg0: i32) -> (i32, i32) {
    %c0_i32 = arith.constant 0 : i32
    %c0_i32_0 = arith.constant 0 : i32
    %c0_i32_1 = arith.constant 0 : i32
    return %c0_i32, %c0_i32_0 : i32, i32
  }
  func.func @transform_5(%arg0: i32) -> (i32, i32) {
    %c0_i32 = arith.constant 0 : i32
    %c0_i32_0 = arith.constant 0 : i32
    %c0_i32_1 = arith.constant 0 : i32
    return %c0_i32, %c0_i32_0 : i32, i32
  }
  func.func @transform_6(%arg0: i32) -> (i32, i32) {
    %c0_i32 = arith.constant 0 : i32
    %c0_i32_0 = arith.constant 0 : i32
    return %arg0, %c0_i32 : i32, i32
  }
  func.func @transform_7(%arg0: i32) -> (i32, i32) {
    %c0_i32 = arith.constant 0 : i32
    %c0_i32_0 = arith.constant 0 : i32
    return %arg0, %c0_i32 : i32, i32
  }
}

</mosaic_0001>

<llo_original>
// kernel: tpu_custom_call.1
$region0: #{tpu_custom_call.1}
  #allocation0 [shape = 'u32[]', space=smem, size = 0x4, offset = 0x4, fixed_abs, tag = 'smem constant byte address 0x4 - core index']
  #allocation1 [shape = 'u32[144,128]{1,0:T(1,128)}', space=vmem, size = 0x12000, scoped, tag = 'internal scratch']
  %s0 = inlined_call_operand.vmem [shape: f32[8,32], index: 0, kind: input, shape index: {}]
  %s1 = inlined_call_operand.vmem [shape: f32[8,128], index: 1, kind: input, shape index: {}]
  %s2 = inlined_call_operand.vmem [shape: f32[32,17], index: 2, kind: input, shape index: {}]
  %s3 = inlined_call_operand.vmem [shape: f32[128,128], index: 3, kind: input, shape index: {}]
  %s4 = inlined_call_operand.vmem [shape: f32[128,8], index: 4, kind: input, shape index: {}]
  %s5 = inlined_call_operand.vmem [shape: f32[8,128], index: 5, kind: input, shape index: {}]
  %s6 = inlined_call_operand.hbm [shape: f32[8,16], index: 6, kind: output, shape index: {0}]
  %s7 = inlined_call_operand.hbm [shape: f32[8,128], index: 7, kind: output, shape index: {1}]
  %8 = xla_tuple %s6, %s7
  %s9 = sld [smem:[#allocation0]]
  $region42: #{tpu_custom_call.1} parent=0
    _
  %s11 = ssub.s32 1, %s9
  %s12 = scalar_select 0, %s11, %s9
  $region1: #{tpu_custom_call.1} parent=0
    #allocation2 [shape = 'u8[4096]{0}', space=vmem, size = 0x1000, scoped, tag = 'output window, operand 0, single buffered']
    #allocation3 [shape = 's32[1]{0}', space=sflag, size = 0x4, scoped, tag = 'scoped memory for tpu_custom_call.1']
    #allocation4 [shape = 'u8[4096]{0}', space=vmem, size = 0x1000, scoped, tag = 'output window, operand 1, single buffered']
    #allocation5 [shape = 's32[1]{0}', space=sflag, size = 0x4, scoped, tag = 'scoped memory for tpu_custom_call.1']
    %13 = vsyncpa [#allocation3], 0
    %14 = vsyncpa [#allocation5], 0
    // Predicated region
    $region2: #{tpu_custom_call.1} parent=1 // pred_check
      _
    $region3: #{tpu_custom_call.1} parent=1 // pred_check_branch
      %16 = sbr.rel (0) target = $region5
    $region4: #{tpu_custom_call.1} parent=1 // pred_region
      _
    $region5: #{tpu_custom_call.1} parent=1 // pred_fallthru
      _
    // Predicated region
    $region6: #{tpu_custom_call.1} parent=1 // pred_check
      _
    $region7: #{tpu_custom_call.1} parent=1 // pred_check_branch
      %18 = sbr.rel (0) target = $region9
    $region8: #{tpu_custom_call.1} parent=1 // pred_region
      _
    $region9: #{tpu_custom_call.1} parent=1 // pred_fallthru
      _
    // Predicated region
    $region10: #{tpu_custom_call.1} parent=1 // pred_check
      _
    $region11: #{tpu_custom_call.1} parent=1 // pred_check_branch
      %20 = sbr.rel (0) target = $region13
    $region12: #{tpu_custom_call.1} parent=1 // pred_region
      _
    $region13: #{tpu_custom_call.1} parent=1 // pred_fallthru
      _
    // Predicated region
    $region14: #{tpu_custom_call.1} parent=1 // pred_check
      _
    $region15: #{tpu_custom_call.1} parent=1 // pred_check_branch
      %22 = sbr.rel (0) target = $region17
    $region16: #{tpu_custom_call.1} parent=1 // pred_region
      _
    $region17: #{tpu_custom_call.1} parent=1 // pred_fallthru
      _
    // Predicated region
    $region18: #{tpu_custom_call.1} parent=1 // pred_check
      _
    $region19: #{tpu_custom_call.1} parent=1 // pred_check_branch
      %24 = sbr.rel (0) target = $region21
    $region20: #{tpu_custom_call.1} parent=1 // pred_region
      _
    $region21: #{tpu_custom_call.1} parent=1 // pred_fallthru
      _
    // Predicated region
    $region22: #{tpu_custom_call.1} parent=1 // pred_check
      _
    $region23: #{tpu_custom_call.1} parent=1 // pred_check_branch
      %26 = sbr.rel (0) target = $region25
    $region24: #{tpu_custom_call.1} parent=1 // pred_region
      _
    $region25: #{tpu_custom_call.1} parent=1 // pred_fallthru
      _
    %v27 = vld [vmem:[%s0] sm:$0xff]
    %v28 = vld [vmem:[%s2] sm:$0xff]
    %v29 = vld [vmem:[%s2 + $0x8] sm:$0xff]
    %v30 = vld [vmem:[%s2 + $0x10] sm:$0xff]
    %v31 = vld [vmem:[%s2 + $0x18] sm:$0xff]
    %vm32 = vcmask 261120
    %v34 = vsel %vm32, %v27, 0
    %36 = vmatprep.subr.mxu0 0.0
    %37 = vmatpush1.msra.mxu0 %v28
    %38 = vmatprep.subr.mxu0 0.0
    %39 = vmatpush1.msra.mxu0 %v29
    %40 = vmatprep.subr.mxu0 0.0
    %41 = vmatpush1.msra.mxu0 %v30
    %42 = vmatprep.subr.mxu0 0.0
    %43 = vmatpush1.msra.mxu0 %v31
    %44 = vmatprep.subr.mxu0 0.0
    %45 = vmatpush1.msra.mxu0 0.0
    %46 = vmatprep.subr.mxu0 0.0
    %47 = vmatpush1.msra.mxu0 0.0
    %48 = vmatprep.subr.mxu0 0.0
    %49 = vmatpush1.msra.mxu0 0.0
    %50 = vmatprep.subr.mxu0 0.0
    %51 = vmatpush1.msra.mxu0 0.0
    %52 = vmatprep.subr.mxu0 0.0
    %53 = vmatpush1.msra.mxu0 0.0
    %54 = vmatprep.subr.mxu0 0.0
    %55 = vmatpush1.msra.mxu0 0.0
    %56 = vmatprep.subr.mxu0 0.0
    %57 = vmatpush1.msra.mxu0 0.0
    %58 = vmatprep.subr.mxu0 0.0
    %59 = vmatpush1.msra.mxu0 0.0
    %60 = vmatprep.subr.mxu0 0.0
    %61 = vmatpush1.msra.mxu0 0.0
    %62 = vmatprep.subr.mxu0 0.0
    %63 = vmatpush1.msra.mxu0 0.0
    %64 = vmatprep.subr.mxu0 0.0
    %65 = vmatpush1.msra.mxu0 0.0
    %66 = vmatprep.subr.mxu0 0.0
    %67 = vmatpush1.msra.mxu0 0.0
    %68 = vmatprep.subr.mxu0 0.0
    %69 = vmatpush1.msra.mxu0 0.0
    %70 = vmatprep.subr.mxu0 0.0
    %71 = vmatpush1.msra.mxu0 0.0
    %72 = vmatprep.subr.mxu0 0.0
    %73 = vmatpush1.msra.mxu0 0.0
    %74 = vmatprep.subr.mxu0 0.0
    %75 = vmatpush1.msra.mxu0 0.0
    %76 = vmatprep.subr.mxu0 0.0
    %77 = vmatpush1.msra.mxu0 0.0
    %78 = vmatprep.subr.mxu0 0.0
    %79 = vmatpush1.msra.mxu0 0.0
    %80 = vmatprep.subr.mxu0 0.0
    %81 = vmatpush1.msra.mxu0 0.0
    %82 = vmatprep.subr.mxu0 0.0
    %83 = vmatpush1.msra.mxu0 0.0
    %84 = vmatprep.subr.mxu0 0.0
    %85 = vmatpush1.msra.mxu0 0.0
    %86 = vmatprep.subr.mxu0 0.0
    %87 = vmatpush1.msra.mxu0 0.0
    %88 = vmatprep.subr.mxu0 0.0
    %89 = vmatpush1.msra.mxu0 0.0
    %90 = vmatprep.subr.mxu0 0.0
    %91 = vmatpush1.msra.mxu0 0.0
    %92 = vmatprep.subr.mxu0 0.0
    %93 = vmatpush1.msra.mxu0 0.0
    %94 = vmatprep.subr.mxu0 0.0
    %95 = vmatpush1.msra.mxu0 0.0
    %96 = vmatprep.subr.mxu0 0.0
    %97 = vmatpush1.msra.mxu0 0.0
    %98 = vmatprep.subr.mxu0 0.0
    %99 = vmatpush1.msra.mxu0 0.0
    %100 = vmatprep.mubr.f32.mxu0 0.0
    %101 = vmatmul.mubr.f32.gmra.mrb[0].mxu0 %v34
    %v102 = vpop.f32.mrb[0].mxu0
    %v103 = vadd.f32 0.0, %v102
    %v104 = vpop.f32.mrb[0].mxu0
    %105 = vdwg.mxu0
    %vm106 = vcmask 130048
    %107 = vst.msk [vmem:[#allocation2] sm:$0xff] %vm106, %v103
    %v108 = vld [vmem:[%s1] sm:$0xff]
    %v109 = vld [vmem:[%s3] sm:$0xff]
    %v110 = vld [vmem:[%s3 + $0x8] sm:$0xff]
    %v111 = vld [vmem:[%s3 + $0x10] sm:$0xff]
    %v112 = vld [vmem:[%s3 + $0x18] sm:$0xff]
    %v113 = vld [vmem:[%s3 + $0x20] sm:$0xff]
    %v114 = vld [vmem:[%s3 + $0x28] sm:$0xff]
    %v115 = vld [vmem:[%s3 + $0x30] sm:$0xff]
    %v116 = vld [vmem:[%s3 + $0x38] sm:$0xff]
    %v117 = vld [vmem:[%s3 + $0x40] sm:$0xff]
    %v118 = vld [vmem:[%s3 + $0x48] sm:$0xff]
    %v119 = vld [vmem:[%s3 + $0x50] sm:$0xff]
    %v120 = vld [vmem:[%s3 + $0x58] sm:$0xff]
    %v121 = vld [vmem:[%s3 + $0x60] sm:$0xff]
    %v122 = vld [vmem:[%s3 + $0x68] sm:$0xff]
    %v123 = vld [vmem:[%s3 + $0x70] sm:$0xff]
    %v124 = vld [vmem:[%s3 + $0x78] sm:$0xff]
    %125 = vmatprep.subr.mxu0 0.0
    %126 = vmatpush1.msra.mxu0 %v109
    %127 = vmatprep.subr.mxu0 0.0
    %128 = vmatpush1.msra.mxu0 %v110
    %129 = vmatprep.subr.mxu0 0.0
    %130 = vmatpush1.msra.mxu0 %v111
    %131 = vmatprep.subr.mxu0 0.0
    %132 = vmatpush1.msra.mxu0 %v112
    %133 = vmatprep.subr.mxu0 0.0
    %134 = vmatpush1.msra.mxu0 %v113
    %135 = vmatprep.subr.mxu0 0.0
    %136 = vmatpush1.msra.mxu0 %v114
    %137 = vmatprep.subr.mxu0 0.0
    %138 = vmatpush1.msra.mxu0 %v115
    %139 = vmatprep.subr.mxu0 0.0
    %140 = vmatpush1.msra.mxu0 %v116
    %141 = vmatprep.subr.mxu0 0.0
    %142 = vmatpush1.msra.mxu0 %v117
    %143 = vmatprep.subr.mxu0 0.0
    %144 = vmatpush1.msra.mxu0 %v118
    %145 = vmatprep.subr.mxu0 0.0
    %146 = vmatpush1.msra.mxu0 %v119
    %147 = vmatprep.subr.mxu0 0.0
    %148 = vmatpush1.msra.mxu0 %v120
    %149 = vmatprep.subr.mxu0 0.0
    %150 = vmatpush1.msra.mxu0 %v121
    %151 = vmatprep.subr.mxu0 0.0
    %152 = vmatpush1.msra.mxu0 %v122
    %153 = vmatprep.subr.mxu0 0.0
    %154 = vmatpush1.msra.mxu0 %v123
    %155 = vmatprep.subr.mxu0 0.0
    %156 = vmatpush1.msra.mxu0 %v124
    %157 = vmatprep.subr.mxu0 0.0
    %158 = vmatpush1.msra.mxu0 0.0
    %159 = vmatprep.subr.mxu0 0.0
    %160 = vmatpush1.msra.mxu0 0.0
    %161 = vmatprep.subr.mxu0 0.0
    %162 = vmatpush1.msra.mxu0 0.0
    %163 = vmatprep.subr.mxu0 0.0
    %164 = vmatpush1.msra.mxu0 0.0
    %165 = vmatprep.subr.mxu0 0.0
    %166 = vmatpush1.msra.mxu0 0.0
    %167 = vmatprep.subr.mxu0 0.0
    %168 = vmatpush1.msra.mxu0 0.0
    %169 = vmatprep.subr.mxu0 0.0
    %170 = vmatpush1.msra.mxu0 0.0
    %171 = vmatprep.subr.mxu0 0.0
    %172 = vmatpush1.msra.mxu0 0.0
    %173 = vmatprep.subr.mxu0 0.0
    %174 = vmatpush1.msra.mxu0 0.0
    %175 = vmatprep.subr.mxu0 0.0
    %176 = vmatpush1.msra.mxu0 0.0
    %177 = vmatprep.subr.mxu0 0.0
    %178 = vmatpush1.msra.mxu0 0.0
    %179 = vmatprep.subr.mxu0 0.0
    %180 = vmatpush1.msra.mxu0 0.0
    %181 = vmatprep.subr.mxu0 0.0
    %182 = vmatpush1.msra.mxu0 0.0
    %183 = vmatprep.subr.mxu0 0.0
    %184 = vmatpush1.msra.mxu0 0.0
    %185 = vmatprep.subr.mxu0 0.0
    %186 = vmatpush1.msra.mxu0 0.0
    %187 = vmatprep.subr.mxu0 0.0
    %188 = vmatpush1.msra.mxu0 0.0
    %189 = vmatprep.mubr.f32.mxu0 0.0
    %190 = vmatmul.mubr.f32.gmra.mrb[0].mxu0 %v108
    %v191 = vpop.f32.mrb[0].mxu0
    %v192 = vadd.f32 0.0, %v191
    %v193 = vpop.f32.mrb[0].mxu0
    %194 = vdwg.mxu0
    %v195 = vld [vmem:[%s4] sm:$0xff]
    %v196 = vld [vmem:[%s4 + $0x8] sm:$0xff]
    %v197 = vld [vmem:[%s4 + $0x10] sm:$0xff]
    %v198 = vld [vmem:[%s4 + $0x18] sm:$0xff]
    %v199 = vld [vmem:[%s4 + $0x20] sm:$0xff]
    %v200 = vld [vmem:[%s4 + $0x28] sm:$0xff]
    %v201 = vld [vmem:[%s4 + $0x30] sm:$0xff]
    %v202 = vld [vmem:[%s4 + $0x38] sm:$0xff]
    %v203 = vld [vmem:[%s4 + $0x40] sm:$0xff]
    %v204 = vld [vmem:[%s4 + $0x48] sm:$0xff]
    %v205 = vld [vmem:[%s4 + $0x50] sm:$0xff]
    %v206 = vld [vmem:[%s4 + $0x58] sm:$0xff]
    %v207 = vld [vmem:[%s4 + $0x60] sm:$0xff]
    %v208 = vld [vmem:[%s4 + $0x68] sm:$0xff]
    %v209 = vld [vmem:[%s4 + $0x70] sm:$0xff]
    %v210 = vld [vmem:[%s4 + $0x78] sm:$0xff]
    %212 = vset.pattern.permute.xlu0 16
    %213 = vperm.xlu0 %212, %v103
    %v214 = vpop.permute.xlu0 %213
    %216 = vmatprep.subr.mxu0 0.0
    %217 = vmatpush1.msra.mxu0 %v195
    %218 = vmatprep.subr.mxu0 0.0
    %219 = vmatpush1.msra.mxu0 %v196
    %220 = vmatprep.subr.mxu0 0.0
    %221 = vmatpush1.msra.mxu0 %v197
    %222 = vmatprep.subr.mxu0 0.0
    %223 = vmatpush1.msra.mxu0 %v198
    %224 = vmatprep.subr.mxu0 0.0
    %225 = vmatpush1.msra.mxu0 %v199
    %226 = vmatprep.subr.mxu0 0.0
    %227 = vmatpush1.msra.mxu0 %v200
    %228 = vmatprep.subr.mxu0 0.0
    %229 = vmatpush1.msra.mxu0 %v201
    %230 = vmatprep.subr.mxu0 0.0
    %231 = vmatpush1.msra.mxu0 %v202
    %232 = vmatprep.subr.mxu0 0.0
    %233 = vmatpush1.msra.mxu0 %v203
    %234 = vmatprep.subr.mxu0 0.0
    %235 = vmatpush1.msra.mxu0 %v204
    %236 = vmatprep.subr.mxu0 0.0
    %237 = vmatpush1.msra.mxu0 %v205
    %238 = vmatprep.subr.mxu0 0.0
    %239 = vmatpush1.msra.mxu0 %v206
    %240 = vmatprep.subr.mxu0 0.0
    %241 = vmatpush1.msra.mxu0 %v207
    %242 = vmatprep.subr.mxu0 0.0
    %243 = vmatpush1.msra.mxu0 %v208
    %244 = vmatprep.subr.mxu0 0.0
    %245 = vmatpush1.msra.mxu0 %v209
    %246 = vmatprep.subr.mxu0 0.0
    %247 = vmatpush1.msra.mxu0 %v210
    %248 = vmatprep.subr.mxu0 0.0
    %249 = vmatpush1.msra.mxu0 0.0
    %250 = vmatprep.subr.mxu0 0.0
    %251 = vmatpush1.msra.mxu0 0.0
    %252 = vmatprep.subr.mxu0 0.0
    %253 = vmatpush1.msra.mxu0 0.0
    %254 = vmatprep.subr.mxu0 0.0
    %255 = vmatpush1.msra.mxu0 0.0
    %256 = vmatprep.subr.mxu0 0.0
    %257 = vmatpush1.msra.mxu0 0.0
    %258 = vmatprep.subr.mxu0 0.0
    %259 = vmatpush1.msra.mxu0 0.0
    %260 = vmatprep.subr.mxu0 0.0
    %261 = vmatpush1.msra.mxu0 0.0
    %262 = vmatprep.subr.mxu0 0.0
    %263 = vmatpush1.msra.mxu0 0.0
    %264 = vmatprep.subr.mxu0 0.0
    %265 = vmatpush1.msra.mxu0 0.0
    %266 = vmatprep.subr.mxu0 0.0
    %267 = vmatpush1.msra.mxu0 0.0
    %268 = vmatprep.subr.mxu0 0.0
    %269 = vmatpush1.msra.mxu0 0.0
    %270 = vmatprep.subr.mxu0 0.0
    %271 = vmatpush1.msra.mxu0 0.0
    %272 = vmatprep.subr.mxu0 0.0
    %273 = vmatpush1.msra.mxu0 0.0
    %274 = vmatprep.subr.mxu0 0.0
    %275 = vmatpush1.msra.mxu0 0.0
    %276 = vmatprep.subr.mxu0 0.0
    %277 = vmatpush1.msra.mxu0 0.0
    %278 = vmatprep.subr.mxu0 0.0
    %279 = vmatpush1.msra.mxu0 0.0
    %280 = vmatprep.mubr.f32.mxu0 0.0
    %281 = vmatmul.mubr.f32.gmra.mrb[0].mxu0 %v108
    %v282 = vpop.f32.mrb[0].mxu0
    %v283 = vadd.f32 %v214, %v282
    %v284 = vpop.f32.mrb[0].mxu0
    %285 = vdwg.mxu0
    %vm286 = vcmp.gt.f32.partialorder %v283, 0.0
    %v287 = vmul.f32 %v283, 0.01
    %v288 = vsel %vm286, %v283, %v287
    %vm289 = vcmask 64512
    %v290 = vsel %vm289, %v288, -inf
    %291 = vmax.xlane.f32.xlu0 %v290
    %v292 = vpop.xlane.xlu0 %291
    %v293 = vsub.f32 %v288, %v292
    %v294 = vmul.f32 %v293, 1.442695
    %v295 = vpow.pop %v294
    %v296 = vsel %vm289, %v295, 0.0
    %297 = vadd.xlane.f32.xlu0 %v296
    %v298 = vpop.xlane.xlu0 %297
    %v299 = vrcp.pop %v298
    %v300 = vmul.f32 %v295, %v299
    %v301 = vld [vmem:[%s5] sm:$0xff]
    %v303 = vsel %vm289, %v300, 0
    %305 = vmatprep.subr.mxu0 0.0
    %306 = vmatpush1.msra.mxu0 %v301
    %307 = vmatprep.subr.mxu0 0.0
    %308 = vmatpush1.msra.mxu0 0.0
    %309 = vmatprep.subr.mxu0 0.0
    %310 = vmatpush1.msra.mxu0 0.0
    %311 = vmatprep.subr.mxu0 0.0
    %312 = vmatpush1.msra.mxu0 0.0
    %313 = vmatprep.subr.mxu0 0.0
    %314 = vmatpush1.msra.mxu0 0.0
    %315 = vmatprep.subr.mxu0 0.0
    %316 = vmatpush1.msra.mxu0 0.0
    %317 = vmatprep.subr.mxu0 0.0
    %318 = vmatpush1.msra.mxu0 0.0
    %319 = vmatprep.subr.mxu0 0.0
    %320 = vmatpush1.msra.mxu0 0.0
    %321 = vmatprep.subr.mxu0 0.0
    %322 = vmatpush1.msra.mxu0 0.0
    %323 = vmatprep.subr.mxu0 0.0
    %324 = vmatpush1.msra.mxu0 0.0
    %325 = vmatprep.subr.mxu0 0.0
    %326 = vmatpush1.msra.mxu0 0.0
    %327 = vmatprep.subr.mxu0 0.0
    %328 = vmatpush1.msra.mxu0 0.0
    %329 = vmatprep.subr.mxu0 0.0
    %330 = vmatpush1.msra.mxu0 0.0
    %331 = vmatprep.subr.mxu0 0.0
    %332 = vmatpush1.msra.mxu0 0.0
    %333 = vmatprep.subr.mxu0 0.0
    %334 = vmatpush1.msra.mxu0 0.0
    %335 = vmatprep.subr.mxu0 0.0
    %336 = vmatpush1.msra.mxu0 0.0
    %337 = vmatprep.subr.mxu0 0.0
    %338 = vmatpush1.msra.mxu0 0.0
    %339 = vmatprep.subr.mxu0 0.0
    %340 = vmatpush1.msra.mxu0 0.0
    %341 = vmatprep.subr.mxu0 0.0
    %342 = vmatpush1.msra.mxu0 0.0
    %343 = vmatprep.subr.mxu0 0.0
    %344 = vmatpush1.msra.mxu0 0.0
    %345 = vmatprep.subr.mxu0 0.0
    %346 = vmatpush1.msra.mxu0 0.0
    %347 = vmatprep.subr.mxu0 0.0
    %348 = vmatpush1.msra.mxu0 0.0
    %349 = vmatprep.subr.mxu0 0.0
    %350 = vmatpush1.msra.mxu0 0.0
    %351 = vmatprep.subr.mxu0 0.0
    %352 = vmatpush1.msra.mxu0 0.0
    %353 = vmatprep.subr.mxu0 0.0
    %354 = vmatpush1.msra.mxu0 0.0
    %355 = vmatprep.subr.mxu0 0.0
    %356 = vmatpush1.msra.mxu0 0.0
    %357 = vmatprep.subr.mxu0 0.0
    %358 = vmatpush1.msra.mxu0 0.0
    %359 = vmatprep.subr.mxu0 0.0
    %360 = vmatpush1.msra.mxu0 0.0
    %361 = vmatprep.subr.mxu0 0.0
    %362 = vmatpush1.msra.mxu0 0.0
    %363 = vmatprep.subr.mxu0 0.0
    %364 = vmatpush1.msra.mxu0 0.0
    %365 = vmatprep.subr.mxu0 0.0
    %366 = vmatpush1.msra.mxu0 0.0
    %367 = vmatprep.subr.mxu0 0.0
    %368 = vmatpush1.msra.mxu0 0.0
    %369 = vmatprep.mubr.f32.mxu0 0.0
    %370 = vmatmul.mubr.f32.gmra.mrb[0].mxu0 %v303
    %v371 = vpop.f32.mrb[0].mxu0
    %v372 = vadd.f32 0.0, %v371
    %v373 = vpop.f32.mrb[0].mxu0
    %374 = vdwg.mxu0
    %v375 = vmul.f32 %v372, %v192
    %376 = vst [vmem:[#allocation4] sm:$0xff] %v375
    // Predicated region
    $region26: #{tpu_custom_call.1} parent=1 // pred_check
      _
    $region27: #{tpu_custom_call.1} parent=1 // pred_check_branch
      %378 = sbr.rel (0) target = $region29
    $region28: #{tpu_custom_call.1} parent=1 // pred_region
      %s380 = ssub.s32 128, 128
      %381 = vsyncadd [#allocation3], %s380
      %s383 = sshll.u32 [#allocation2], 4
      %s384 = int_to_ptr.vmem [resolvable:$true] %s383
      %386 = dma.vmem_to_hbm [thread:$0]  %s384, 128, %s6, [#allocation3]
    $region29: #{tpu_custom_call.1} parent=1 // pred_fallthru
      _
    // Predicated region
    $region30: #{tpu_custom_call.1} parent=1 // pred_check
      _
    $region31: #{tpu_custom_call.1} parent=1 // pred_check_branch
      %388 = sbr.rel (0) target = $region33
    $region32: #{tpu_custom_call.1} parent=1 // pred_region
      %s390 = ssub.s32 128, 128
      %391 = vsyncadd [#allocation5], %s390
      %s393 = sshll.u32 [#allocation4], 4
      %s394 = int_to_ptr.vmem [resolvable:$true] %s393
      %396 = dma.vmem_to_hbm [thread:$0]  %s394, 128, %s7, [#allocation5]
    $region33: #{tpu_custom_call.1} parent=1 // pred_fallthru
      _
    // Predicated region
    $region34: #{tpu_custom_call.1} parent=1 // pred_check
      _
    $region35: #{tpu_custom_call.1} parent=1 // pred_check_branch
      %398 = sbr.rel (0) target = $region37
    $region36: #{tpu_custom_call.1} parent=1 // pred_region
      %399 = dma.done [#allocation3], 128
    $region37: #{tpu_custom_call.1} parent=1 // pred_fallthru
      _
    // Predicated region
    $region38: #{tpu_custom_call.1} parent=1 // pred_check
      _
    $region39: #{tpu_custom_call.1} parent=1 // pred_check_branch
      %401 = sbr.rel (0) target = $region41
    $region40: #{tpu_custom_call.1} parent=1 // pred_region
      %402 = dma.done [#allocation5], 128
    $region41: #{tpu_custom_call.1} parent=1 // pred_fallthru
      _
    %403 = vsyncpa [#allocation3], 1
    %404 = vsyncpa [#allocation5], 1

</llo_original>
